<compile_context>
chip_gen: v7x
topology: tpu7x:2x2x1
jax: 0.10.0
libtpu: 0.0.40
codegen_flags: <defaults>
</compile_context>

<pallas_src>
import functools

import jax
import jax.numpy as jnp
from jax import lax
from jax.experimental import pallas as pl
from jax.experimental.pallas import tpu as pltpu


# --------------------------------------------------------------------------
# Hardware / tiling helpers
# --------------------------------------------------------------------------
def _chip_kind():
    try:
        return getattr(jax.devices()[0], "device_kind", "").lower()
    except Exception:
        return ""


def _vmem_capacity_bytes(kind):
    """Per-TensorCore physical VMEM, queried when possible."""
    try:
        info = pltpu.get_tpu_info()
        for attr in ("vmem_capacity_bytes", "vmem_bytes", "vmem_size_bytes"):
            val = getattr(info, attr, None)
            if val:
                return int(val)
    except Exception:
        pass
    # v7x: 64 MiB per TC; v5e/v6e: 128 MiB.
    return (64 << 20) if "v7" in kind else (128 << 20)


def _num_tensorcores(kind):
    return 2 if ("v7" in kind or "v4" in kind or "v5p" in kind) else 1


def _has_bf16_eup(kind):
    # v6e/v7x have a bf16 EUP/VPU path; v5e and earlier do not.
    return ("v6" in kind) or ("v7" in kind)


def _sublane_align(dtype):
    # Sub-32-bit dtypes pack along sublanes: f32 -> 8, bf16 -> 16, int8 -> 32.
    return max(8, 32 // max(jnp.dtype(dtype).itemsize, 1))


def _pick_tile(n, target, align=8):
    """Largest divisor of n that is <= target and a multiple of `align`.
    Falls back to the full dim (always a legal block size)."""
    if n <= target:
        return n
    for t in range(min(target, n), align - 1, -1):
        if n % t == 0 and t % align == 0:
            return t
    return n


def _block_spec(block_shape, index_map, buffer_count=None):
    """BlockSpec with an optional pipeline depth; falls back gracefully if
    pipeline_mode / pl.Buffered is unavailable in this jax version."""
    if buffer_count is not None:
        try:
            return pl.BlockSpec(block_shape, index_map,
                                pipeline_mode=pl.Buffered(buffer_count))
        except (TypeError, AttributeError):
            pass
    return pl.BlockSpec(block_shape, index_map)


# --------------------------------------------------------------------------
# Kernel 1: per (batch, Lq-tile) step, full Lk row -> returns ctx AND attention
# --------------------------------------------------------------------------
def _sdpa_attn_kernel(q_ref, k_ref, v_ref, ctx_ref, attn_ref, *, scale,
                      exp_dtype):
    q = q_ref[...]                                    # (TQ, D), input dtype
    if scale:  # mirrors the reference's `if scale:` (falsy => no scaling)
        q = q * jnp.asarray(scale, dtype=q.dtype)     # fold scale into q tile

    # attention = q @ k^T on the MXU, contracting dim 1 of q with dim 1 of k
    # (no explicit k.T relayout), accumulate in f32.
    s = lax.dot_general(
        q, k_ref[...],
        dimension_numbers=(((1,), (1,)), ((), ())),
        preferred_element_type=jnp.float32)           # (TQ, Lk) f32

    # TODO(synk): attn_mask (masked_fill_) path not implemented; reference
    # default is None.

    # softmax over the last dim (dim=2 of the full tensor), numerically stable.
    m = jnp.max(s, axis=-1, keepdims=True)
    e = jnp.exp((s - m).astype(exp_dtype))            # bf16 EUP path on v6e/v7x
    denom = jnp.sum(e, axis=-1, keepdims=True, dtype=jnp.float32)
    p = e * pl.reciprocal(denom, approx=True).astype(e.dtype)

    # dropout(p=0.0) == identity

    # context = attention @ v on the MXU; probabilities in v's dtype.
    ctx = jnp.dot(p.astype(v_ref.dtype), v_ref[...],
                  preferred_element_type=jnp.float32)  # (TQ, Dv)

    ctx_ref[...] = ctx.astype(ctx_ref.dtype)
    attn_ref[...] = p.astype(attn_ref.dtype)


# --------------------------------------------------------------------------
# Kernel 2: flash-attention structure (online softmax over Lk tiles), ctx only
# --------------------------------------------------------------------------
def _sdpa_flash_kernel(q_ref, k_ref, v_ref, ctx_ref, m_sc, l_sc, acc_sc, *,
                       scale, exp_dtype):
    kv = pl.program_id(2)

    @pl.when(kv == 0)
    def _():
        m_sc[...] = jnp.full_like(m_sc, -jnp.inf)
        l_sc[...] = jnp.zeros_like(l_sc)
        acc_sc[...] = jnp.zeros_like(acc_sc)

    q = q_ref[...]                                    # (TQ, D)
    if scale:
        q = q * jnp.asarray(scale, dtype=q.dtype)

    s = lax.dot_general(
        q, k_ref[...],
        dimension_numbers=(((1,), (1,)), ((), ())),
        preferred_element_type=jnp.float32)           # (TQ, TK) f32

    m_prev = m_sc[...]
    m_new = jnp.maximum(m_prev, jnp.max(s, axis=-1, keepdims=True))
    alpha = jnp.exp(m_prev - m_new)                   # (TQ, 1) f32
    p = jnp.exp((s - m_new).astype(exp_dtype))        # bf16 EUP path on v6e/v7x
    l_sc[...] = alpha * l_sc[...] + jnp.sum(p, axis=-1, keepdims=True,
                                            dtype=jnp.float32)
    acc_sc[...] = alpha * acc_sc[...] + jnp.dot(
        p.astype(v_ref.dtype), v_ref[...], preferred_element_type=jnp.float32)
    m_sc[...] = m_new

    @pl.when(kv == pl.num_programs(2) - 1)
    def _():
        ctx_ref[...] = (acc_sc[...] *
                        pl.reciprocal(l_sc[...], approx=True)
                        ).astype(ctx_ref.dtype)


# --------------------------------------------------------------------------
# Wrapper
# --------------------------------------------------------------------------
def scaled_dot_product_attention(q, k, v, scale=None, attn_mask=None,
                                 return_attention=True,
                                 tq_target=None, tk_target=512):
    """Forward pass of the reference ScaledDotProductAttention.

    Note: like the reference module, `scale=None` (or 0) applies NO scaling
    (the torch code does `if scale:`), it does NOT default to 1/sqrt(D).
    The attention matrix (when returned) is emitted in the input dtype.
    """
    if attn_mask is not None:
        # TODO(synk): attn_mask (masked_fill_) has no path here; reference
        # default is None.
        raise NotImplementedError("attn_mask is not supported")

    B, Lq, D = q.shape
    Bk, Lk, Dk = k.shape
    Bv, Lkv, Dv = v.shape
    assert B == Bk == Bv and D == Dk and Lk == Lkv

    kind = _chip_kind()
    vmem_cap = _vmem_capacity_bytes(kind)
    budget = int(vmem_cap * 0.85)                      # leave compiler headroom
    cores = _num_tensorcores(kind)
    itemsize = jnp.dtype(q.dtype).itemsize
    align_q = _sublane_align(q.dtype)

    # bf16 exp only when inputs are already bf16 AND the chip has a bf16 EUP
    # path (v6e/v7x); f32 inputs keep full-precision softmax, v5e stays f32.
    exp_dtype = (jnp.bfloat16
                 if (_has_bf16_eup(kind) and q.dtype == jnp.bfloat16)
                 else jnp.float32)

    # Roofline-derived default Q tile for the flash path (arith. intensity ≈
    # tq flops per K/V byte vs machine balance ~240 v5e / ~620-650 v6e/v7x).
    flash_tq_target = tq_target if tq_target else (
        1024 if _has_bf16_eup(kind) else 512)
    attn_tq_target = tq_target if tq_target else 256
    # Keep the parallel grid axes shardable across all TensorCores (v7x: 2).
    if cores > 1 and B < cores:
        cap = max(align_q, Lq // cores)
        flash_tq_target = min(flash_tq_target, cap)
        attn_tq_target = min(attn_tq_target, cap)

    # Advisory cost estimate so XLA schedules surrounding ops sensibly.
    out_bytes = B * Lq * Dv * itemsize + (B * Lq * Lk * itemsize
                                          if return_attention else 0)
    cost = pl.CostEstimate(
        flops=2 * B * Lq * Lk * (D + Dv),
        transcendentals=B * Lq * Lk,
        bytes_accessed=(B * Lq * D + B * Lk * D + B * Lk * Dv) * itemsize
        + out_bytes)

    if return_attention:
        # The full (B, Lq, Lk) attention matrix must be materialized anyway,
        # so tile over Lq only and keep the whole Lk row per step (exact
        # softmax, one pass). K/V block index is constant within a batch, so
        # single-buffer them; size tq so the O(tq*Lk) working set fits VMEM.
        fixed = (Lk * D + Lk * Dv) * itemsize           # single-buffered K/V
        per_row = (2 * (D + Dv) * itemsize              # q + ctx (dbl-buffered)
                   + 2 * Lk * itemsize                  # attn out (dbl-buffered)
                   + 3 * Lk * 4)                        # f32 s/e/p temporaries
        row_budget = max(align_q, (budget - fixed) // max(per_row, 1))
        tq = _pick_tile(Lq, max(align_q, min(attn_tq_target, row_budget)),
                        align=align_q)
        block_bytes = fixed + tq * per_row

        grid = (B, Lq // tq)
        grid_spec = pltpu.PrefetchScalarGridSpec(
            num_scalar_prefetch=0,
            grid=grid,
            in_specs=[
                _block_spec((pl.Squeezed(), tq, D), lambda b, i: (b, i, 0)),
                _block_spec((pl.Squeezed(), Lk, D), lambda b, i: (b, 0, 0),
                            buffer_count=1),
                _block_spec((pl.Squeezed(), Lk, Dv), lambda b, i: (b, 0, 0),
                            buffer_count=1),
            ],
            out_specs=[
                pl.BlockSpec((pl.Squeezed(), tq, Dv), lambda b, i: (b, i, 0)),
                pl.BlockSpec((pl.Squeezed(), tq, Lk), lambda b, i: (b, i, 0)),
            ],
        )
        out_shape = (
            jax.ShapeDtypeStruct((B, Lq, Dv), q.dtype),   # context
            jax.ShapeDtypeStruct((B, Lq, Lk), q.dtype),   # attention
        )
        kernel = functools.partial(_sdpa_attn_kernel, scale=scale,
                                   exp_dtype=exp_dtype)
        dims = ("parallel", "parallel")
    else:
        # Online-softmax (flash) path: reduction (Lk) axis last, scratch
        # accumulators in f32. tk aligned to 128 (lane dim of the score tile).
        tk = _pick_tile(Lk, tk_target, align=128)
        cand = max(align_q, flash_tq_target)
        while True:
            tq = _pick_tile(Lq, cand, align=align_q)
            block_bytes = (
                2 * (tq * D + tk * D + tk * Dv + tq * Dv) * itemsize  # dbl-buf
                + (tq * Dv + 2 * tq * 128) * 4                        # scratch
                + 3 * tq * tk * 4)                                    # temps
            if block_bytes <= budget or cand <= align_q:
                break
            cand = max(align_q, cand // 2)

        grid = (B, Lq // tq, Lk // tk)
        grid_spec = pltpu.PrefetchScalarGridSpec(
            num_scalar_prefetch=0,
            grid=grid,
            in_specs=[
                pl.BlockSpec((pl.Squeezed(), tq, D), lambda b, i, j: (b, i, 0)),
                pl.BlockSpec((pl.Squeezed(), tk, D), lambda b, i, j: (b, j, 0)),
                pl.BlockSpec((pl.Squeezed(), tk, Dv), lambda b, i, j: (b, j, 0)),
            ],
            out_specs=pl.BlockSpec((pl.Squeezed(), tq, Dv),
                                   lambda b, i, j: (b, i, 0)),
            scratch_shapes=[
                pltpu.VMEM((tq, 1), jnp.float32),    # running max
                pltpu.VMEM((tq, 1), jnp.float32),    # running denom
                pltpu.VMEM((tq, Dv), jnp.float32),   # accumulator
            ],
        )
        out_shape = jax.ShapeDtypeStruct((B, Lq, Dv), q.dtype)
        kernel = functools.partial(_sdpa_flash_kernel, scale=scale,
                                   exp_dtype=exp_dtype)
        dims = ("parallel", "parallel", "arbitrary")

    compiler_kwargs = dict(dimension_semantics=dims)
    vmem_estimate = block_bytes + (4 << 20)           # headroom for misc
    if vmem_estimate > (24 << 20):
        # Never below the default scoped limit, never above ~85% of physical
        # VMEM (generation-aware: 64 MiB/TC on v7x, 128 MiB on v5e/v6e).
        compiler_kwargs["vmem_limit_bytes"] = int(
            min(max(int(vmem_estimate * 1.3), 32 << 20), budget))

    return pl.pallas_call(
        kernel,
        out_shape=out_shape,
        grid_spec=grid_spec,
        compiler_params=pltpu.CompilerParams(**compiler_kwargs),
        cost_estimate=cost,
    )(q, k, v)


# --------------------------------------------------------------------------
# Pure-JAX reference
# --------------------------------------------------------------------------
def _reference(q, k, v, scale=None):
    s = jnp.einsum("bqd,bkd->bqk", q.astype(jnp.float32), k.astype(jnp.float32))
    if scale:
        s = s * scale
    attn = jax.nn.softmax(s, axis=2)
    ctx = jnp.einsum("bqk,bkd->bqd", attn, v.astype(jnp.float32))
    return ctx, attn


if __name__ == "__main__":
    key = jax.random.PRNGKey(0)
    kq, kk, kv = jax.random.split(key, 3)

    # Small shapes consistent with the module (bmm convention: (B, L, D)).
    B, Lq, Lk, D, Dv = 2, 8, 8, 32, 32
    q = jax.random.normal(kq, (B, Lq, D), dtype=jnp.float32)
    k = jax.random.normal(kk, (B, Lk, D), dtype=jnp.float32)
    v = jax.random.normal(kv, (B, Lk, Dv), dtype=jnp.float32)
    scale = 1.0 / (D ** 0.5)

    ctx, attn = scaled_dot_product_attention(q, k, v, scale=scale)
    jax.block_until_ready((ctx, attn))

    ctx_ref, attn_ref = _reference(q, k, v, scale=scale)
    assert jnp.allclose(ctx, ctx_ref, atol=2e-3, rtol=2e-3)
    assert jnp.allclose(attn, attn_ref, atol=2e-3, rtol=2e-3)

    # Moderately larger shapes that exercise the Lq/Lk tiling and the
    # online-softmax (ctx-only) path.
    B2, Lq2, Lk2, D2, Dv2 = 2, 512, 1024, 64, 64
    q2 = jax.random.normal(kq, (B2, Lq2, D2), dtype=jnp.float32)
    k2 = jax.random.normal(kk, (B2, Lk2, D2), dtype=jnp.float32)
    v2 = jax.random.normal(kv, (B2, Lk2, Dv2), dtype=jnp.float32)
    scale2 = 1.0 / (D2 ** 0.5)

    ctx2, attn2 = scaled_dot_product_attention(q2, k2, v2, scale=scale2)
    ctx2_flash = scaled_dot_product_attention(q2, k2, v2, scale=scale2,
                                              return_attention=False)
    jax.block_until_ready((ctx2, attn2, ctx2_flash))

    ctx2_ref, attn2_ref = _reference(q2, k2, v2, scale=scale2)
    assert jnp.allclose(ctx2, ctx2_ref, atol=2e-3, rtol=2e-3)
    assert jnp.allclose(attn2, attn2_ref, atol=2e-3, rtol=2e-3)
    assert jnp.allclose(ctx2_flash, ctx2_ref, atol=2e-3, rtol=2e-3)

    # bf16 smoke test (exercises the bf16 exp / bf16 MXU path on v6e/v7x).
    qb = q2.astype(jnp.bfloat16)
    kb = k2.astype(jnp.bfloat16)
    vb = v2.astype(jnp.bfloat16)
    ctxb = scaled_dot_product_attention(qb, kb, vb, scale=scale2,
                                        return_attention=False)
    jax.block_until_ready(ctxb)
    ctxb_ref, _ = _reference(qb, kb, vb, scale=scale2)
    assert jnp.allclose(ctxb.astype(jnp.float32), ctxb_ref,
                        atol=2.5e-2, rtol=2.5e-2)

    print("KERNEL_OK")
</pallas_src>

<mosaic_0001>
module attributes {stable_mosaic.version = 11 : i64} {
  func.func @_sdpa_attn_kernel(%arg0: i32, %arg1: i32, %arg2: memref<1x8x32xf32, #tpu.memory_space<vmem>>, %arg3: memref<1x8x32xf32, #tpu.memory_space<vmem>>, %arg4: memref<1x8x32xf32, #tpu.memory_space<vmem>>, %arg5: memref<1x8x32xf32, #tpu.memory_space<vmem>>, %arg6: memref<1x8x8xf32, #tpu.memory_space<vmem>>) attributes {dimension_semantics = [#tpu.dimension_semantics<parallel>, #tpu.dimension_semantics<parallel>], iteration_bounds = array<i64: 2, 1>, scalar_prefetch = 0 : i64, scratch_operands = 0 : i64, tpu.core_type = #tpu.core_type<tc>, window_params = [{transform_indices = @transform_0, window_bounds = array<i64: 1, 8, 32>}, {pipeline_mode = #tpu.pipeline_mode<synchronous>, transform_indices = @transform_1, window_bounds = array<i64: 1, 8, 32>}, {pipeline_mode = #tpu.pipeline_mode<synchronous>, transform_indices = @transform_2, window_bounds = array<i64: 1, 8, 32>}, {transform_indices = @transform_3, window_bounds = array<i64: 1, 8, 32>}, {transform_indices = @transform_4, window_bounds = array<i64: 1, 8, 8>}]} {
    %c0 = arith.constant 0 : index
    %c0_0 = arith.constant 0 : index
    %c0_1 = arith.constant 0 : index
    %0 = vector.load %arg2[%c0, %c0_0, %c0_1] : memref<1x8x32xf32, #tpu.memory_space<vmem>>, vector<1x8x32xf32>
    %1 = vector.shape_cast %0 : vector<1x8x32xf32> to vector<8x32xf32>
    %cst = arith.constant 0.176776692 : f32
    %2 = vector.broadcast %cst : f32 to vector<8x32xf32>
    %3 = arith.mulf %1, %2 : vector<8x32xf32>
    %c0_2 = arith.constant 0 : index
    %c0_3 = arith.constant 0 : index
    %c0_4 = arith.constant 0 : index
    %4 = vector.load %arg3[%c0_2, %c0_3, %c0_4] : memref<1x8x32xf32, #tpu.memory_space<vmem>>, vector<1x8x32xf32>
    %5 = vector.shape_cast %4 : vector<1x8x32xf32> to vector<8x32xf32>
    %cst_5 = arith.constant dense<0.000000e+00> : vector<8x8xf32>
    %6 = tpu.matmul %3, %5, %cst_5 {dimension_numbers = #tpu.dot_dimension_numbers<[1], [1], [0], [0], [0, 0, 1, 0], [], []>} : vector<8x32xf32>, vector<8x32xf32>, vector<8x8xf32> -> vector<8x8xf32>
    %cst_6 = arith.constant dense<0xFF800000> : vector<8xf32>
    %7 = vector.multi_reduction <maximumf>, %6, %cst_6 [1] : vector<8x8xf32> to vector<8xf32>
    %8 = vector.shape_cast %7 : vector<8xf32> to vector<8x1xf32>
    %9 = vector.broadcast %8 : vector<8x1xf32> to vector<8x8xf32>
    %10 = arith.subf %6, %9 : vector<8x8xf32>
    %11 = math.exp %10 : vector<8x8xf32>
    %cst_7 = arith.constant dense<0.000000e+00> : vector<8xf32>
    %12 = vector.multi_reduction <add>, %11, %cst_7 [1] : vector<8x8xf32> to vector<8xf32>
    %13 = vector.shape_cast %12 : vector<8xf32> to vector<8x1xf32>
    %14 = tpu.reciprocal %13 {approx = true} : vector<8x1xf32> -> vector<8x1xf32>
    %15 = vector.broadcast %14 : vector<8x1xf32> to vector<8x8xf32>
    %16 = arith.mulf %11, %15 : vector<8x8xf32>
    %c0_8 = arith.constant 0 : index
    %c0_9 = arith.constant 0 : index
    %c0_10 = arith.constant 0 : index
    %17 = vector.load %arg4[%c0_8, %c0_9, %c0_10] : memref<1x8x32xf32, #tpu.memory_space<vmem>>, vector<1x8x32xf32>
    %18 = vector.shape_cast %17 : vector<1x8x32xf32> to vector<8x32xf32>
    %cst_11 = arith.constant dense<0.000000e+00> : vector<8x32xf32>
    %19 = tpu.matmul %16, %18, %cst_11 {dimension_numbers = #tpu.dot_dimension_numbers<[1], [0], [0], [1], [0, 0, 1, 1], [], []>} : vector<8x8xf32>, vector<8x32xf32>, vector<8x32xf32> -> vector<8x32xf32>
    %c0_12 = arith.constant 0 : index
    %c0_13 = arith.constant 0 : index
    %c0_14 = arith.constant 0 : index
    %20 = vector.load %arg5[%c0_12, %c0_13, %c0_14] : memref<1x8x32xf32, #tpu.memory_space<vmem>>, vector<1x8x32xf32>
    %21 = vector.shape_cast %20 : vector<1x8x32xf32> to vector<8x32xf32>
    %22 = vector.shape_cast %19 : vector<8x32xf32> to vector<1x8x32xf32>
    tpu.vector_store %arg5[%c0_12, %c0_13, %c0_14], %22 {strides = array<i32>} : memref<1x8x32xf32, #tpu.memory_space<vmem>>, vector<1x8x32xf32>,
    %c0_15 = arith.constant 0 : index
    %c0_16 = arith.constant 0 : index
    %c0_17 = arith.constant 0 : index
    %23 = vector.load %arg6[%c0_15, %c0_16, %c0_17] : memref<1x8x8xf32, #tpu.memory_space<vmem>>, vector<1x8x8xf32>
    %24 = vector.shape_cast %23 : vector<1x8x8xf32> to vector<8x8xf32>
    %25 = vector.shape_cast %16 : vector<8x8xf32> to vector<1x8x8xf32>
    tpu.vector_store %arg6[%c0_15, %c0_16, %c0_17], %25 {strides = array<i32>} : memref<1x8x8xf32, #tpu.memory_space<vmem>>, vector<1x8x8xf32>,
    return
  }
  func.func @transform_0(%arg0: i32, %arg1: i32) -> (i32, i32, i32) {
    %c0_i32 = arith.constant 0 : i32
    %c0_i32_0 = arith.constant 0 : i32
    return %arg0, %arg1, %c0_i32 : i32, i32, i32
  }
  func.func @transform_1(%arg0: i32, %arg1: i32) -> (i32, i32, i32) {
    %c0_i32 = arith.constant 0 : i32
    %c0_i32_0 = arith.constant 0 : i32
    %c0_i32_1 = arith.constant 0 : i32
    return %arg0, %c0_i32, %c0_i32_0 : i32, i32, i32
  }
  func.func @transform_2(%arg0: i32, %arg1: i32) -> (i32, i32, i32) {
    %c0_i32 = arith.constant 0 : i32
    %c0_i32_0 = arith.constant 0 : i32
    %c0_i32_1 = arith.constant 0 : i32
    return %arg0, %c0_i32, %c0_i32_0 : i32, i32, i32
  }
  func.func @transform_3(%arg0: i32, %arg1: i32) -> (i32, i32, i32) {
    %c0_i32 = arith.constant 0 : i32
    %c0_i32_0 = arith.constant 0 : i32
    return %arg0, %arg1, %c0_i32 : i32, i32, i32
  }
  func.func @transform_4(%arg0: i32, %arg1: i32) -> (i32, i32, i32) {
    %c0_i32 = arith.constant 0 : i32
    %c0_i32_0 = arith.constant 0 : i32
    return %arg0, %arg1, %c0_i32 : i32, i32, i32
  }
}

</mosaic_0001>

<llo_original>
// kernel: tpu_custom_call.1
$region0: #{tpu_custom_call.1}
  #allocation0 [shape = 'u32[]', space=smem, size = 0x4, offset = 0x4, fixed_abs, tag = 'smem constant byte address 0x4 - core index']
  #allocation1 [shape = 'u32[144,128]{1,0:T(1,128)}', space=vmem, size = 0x12000, scoped, tag = 'internal scratch']
  %s0 = inlined_call_operand.hbm [shape: f32[2,8,32], index: 0, kind: input, shape index: {}]
  %s1 = inlined_call_operand.hbm [shape: f32[2,8,32], index: 1, kind: input, shape index: {}]
  %s2 = inlined_call_operand.hbm [shape: f32[2,8,32], index: 2, kind: input, shape index: {}]
  %s3 = inlined_call_operand.hbm [shape: f32[2,8,32], index: 3, kind: output, shape index: {0}]
  %s4 = inlined_call_operand.hbm [shape: f32[2,8,8], index: 4, kind: output, shape index: {1}]
  %5 = xla_tuple %s3, %s4
  %s6 = sld [smem:[#allocation0]]
  $region65: #{tpu_custom_call.1} parent=0
    _
  %s8 = ssub.s32 1, %s6
  %s9 = scalar_select 0, %s8, %s6
  $region1: #{tpu_custom_call.1} parent=0
    #allocation2 [shape = 'u8[8192]{0}', space=vmem, size = 0x2000, scoped, tag = 'input window, operand 0']
    #allocation3 [shape = 's32[2]{0}', space=sflag, size = 0x8, scoped, tag = 'scoped memory for tpu_custom_call.1']
    #allocation4 [shape = 's32[2]{0}', space=sflag, size = 0x8, scoped, tag = 'scoped memory for tpu_custom_call.1']
    #allocation5 [shape = 'u8[4096]{0}', space=vmem, size = 0x1000, scoped, tag = 'input window, operand 1, single buffered']
    #allocation6 [shape = 's32[1]{0}', space=sflag, size = 0x4, scoped, tag = 'scoped memory for tpu_custom_call.1']
    #allocation7 [shape = 'u8[4096]{0}', space=vmem, size = 0x1000, scoped, tag = 'input window, operand 2, single buffered']
    #allocation8 [shape = 'u8[8192]{0}', space=vmem, size = 0x2000, scoped, tag = 'output window, operand 0']
    #allocation9 [shape = 'u8[8192]{0}', space=vmem, size = 0x2000, scoped, tag = 'output window, operand 1']
    #allocation10 [shape = 's32[2]{0}', space=sflag, size = 0x8, scoped, tag = 'scoped memory for tpu_custom_call.1']
    %10 = vsyncpa [#allocation3], 0
    %s11 = scalar_lea.sflag [#allocation3], 1
    %12 = vsyncpa %s11, 0
    %13 = vsyncpa [#allocation6], 0
    %14 = vsyncpa [#allocation4], 0
    %s15 = scalar_lea.sflag [#allocation4], 1
    %16 = vsyncpa %s15, 0
    %17 = vsyncpa [#allocation10], 0
    %s18 = scalar_lea.sflag [#allocation10], 1
    %19 = vsyncpa %s18, 0
    loop: start=0, step=1, limit=4
    $region2: #{tpu_custom_call.1} parent=1 // loop_pre_header
      _
    $region3: #{tpu_custom_call.1} parent=1 // loop_header
      %s21 = sphi 0, %s25
      %p22 = scmp.ge.s32.totalorder %s21, 4
      %s28 = sphi 0, %s40
      %s29 = sphi 0, %s36
      %s30 = sphi 0, %s28
      %s31 = sphi 0, %s29
      %s32 = sphi 0, %s30
      %s33 = sphi 0, %s31
      %s45 = sphi 0, %s47
      %s48 = sphi 0, %s45
      %s49 = sphi 0, %s48
      %s65 = sphi 0, %s49
      %s71 = sphi 0, %s73
      %s74 = sphi 0, %s71
      %s75 = sphi 0, %s74
      %s91 = sphi 0, %s75
      %s97 = sphi 0, %s99
      %s100 = sphi 0, %s97
      %s101 = sphi 0, %s100
      %s117 = sphi 0, %s101
      %s125 = sphi 0, %s127
      %s128 = sphi 0, %s125
      %s129 = sphi 0, %s128
      %s145 = sphi 0, %s129
      %s153 = sphi 0, %s155
      %s156 = sphi 0, %s153
      %s157 = sphi 0, %s156
      %s173 = sphi 0, %s157
    $region4: #{tpu_custom_call.1} parent=1 // loop_header_branch
      %24 = sbr.rel (%p22) target = $region8
    $region5: #{tpu_custom_call.1} parent=1 // loop_body
      %s26 = ssub.s32 %s21, 1
      %s27 = ssub.s32 %s21, 2
      %s34 = sadd.s32 1, %s29
      %p35 = scmp.ge.s32.totalorder %s34, 1
      %s36 = scalar_select %p35, 0, %s34
      %s37 = sadd.s32 1, %s28
      %s38 = scalar_select %p35, %s37, %s28
      %p39 = scmp.ge.s32.totalorder %s38, 2
      %s40 = scalar_select %p39, 0, %s38
      %s41 = ssub.s32 %s28, %s40
      %s42 = ssub.s32 %s29, %s36
      %s43 = sor.u32 %s41, %s42
      %p44 = scmp.eq.s32.totalorder %s43, 0
      %s46 = sadd.s32 %s45, 1
      %s47 = scalar_select %p44, %s45, %s46
      %p50 = pneg %p44
      %p51 = scmp.eq.s32.totalorder %s21, 1
      %p52 = por %p50, %p51
      %p53 = scmp.ne.s32.totalorder %s45, %s48
      %p54 = scmp.eq.s32.totalorder %s21, 0
      %p55 = por %p53, %p54
      %p56 = scmp.ne.s32.totalorder %s45, %s48
      %p57 = scmp.eq.s32.totalorder %s26, 1
      %p58 = por %p56, %p57
      %p59 = scmp.ne.s32.totalorder %s48, %s49
      %p60 = scmp.eq.s32.totalorder %s26, 0
      %p61 = por %p59, %p60
      %p62 = scmp.ne.s32.totalorder %s48, %s49
      %p63 = scmp.eq.s32.totalorder %s27, 1
      %p64 = por %p62, %p63
      %p66 = scmp.ne.s32.totalorder %s49, %s65
      %p67 = scmp.eq.s32.totalorder %s27, 0
      %p68 = por %p66, %p67
      %s69 = ssub.s32 %s28, %s40
      %p70 = scmp.eq.s32.totalorder %s69, 0
      %s72 = sadd.s32 %s71, 1
      %s73 = scalar_select %p70, %s71, %s72
      %p76 = pneg %p70
      %p77 = scmp.eq.s32.totalorder %s21, 1
      %p78 = por %p76, %p77
      %p79 = scmp.ne.s32.totalorder %s71, %s74
      %p80 = scmp.eq.s32.totalorder %s21, 0
      %p81 = por %p79, %p80
      %p82 = scmp.ne.s32.totalorder %s71, %s74
      %p83 = scmp.eq.s32.totalorder %s26, 1
      %p84 = por %p82, %p83
      %p85 = scmp.ne.s32.totalorder %s74, %s75
      %p86 = scmp.eq.s32.totalorder %s26, 0
      %p87 = por %p85, %p86
      %p88 = scmp.ne.s32.totalorder %s74, %s75
      %p89 = scmp.eq.s32.totalorder %s27, 1
      %p90 = por %p88, %p89
      %p92 = scmp.ne.s32.totalorder %s75, %s91
      %p93 = scmp.eq.s32.totalorder %s27, 0
      %p94 = por %p92, %p93
      %s95 = ssub.s32 %s28, %s40
      %p96 = scmp.eq.s32.totalorder %s95, 0
      %s98 = sadd.s32 %s97, 1
      %s99 = scalar_select %p96, %s97, %s98
      %p102 = pneg %p96
      %p103 = scmp.eq.s32.totalorder %s21, 1
      %p104 = por %p102, %p103
      %p105 = scmp.ne.s32.totalorder %s97, %s100
      %p106 = scmp.eq.s32.totalorder %s21, 0
      %p107 = por %p105, %p106
      %p108 = scmp.ne.s32.totalorder %s97, %s100
      %p109 = scmp.eq.s32.totalorder %s26, 1
      %p110 = por %p108, %p109
      %p111 = scmp.ne.s32.totalorder %s100, %s101
      %p112 = scmp.eq.s32.totalorder %s26, 0
      %p113 = por %p111, %p112
      %p114 = scmp.ne.s32.totalorder %s100, %s101
      %p115 = scmp.eq.s32.totalorder %s27, 1
      %p116 = por %p114, %p115
      %p118 = scmp.ne.s32.totalorder %s101, %s117
      %p119 = scmp.eq.s32.totalorder %s27, 0
      %p120 = por %p118, %p119
      %s121 = ssub.s32 %s28, %s40
      %s122 = ssub.s32 %s29, %s36
      %s123 = sor.u32 %s121, %s122
      %p124 = scmp.eq.s32.totalorder %s123, 0
      %s126 = sadd.s32 %s125, 1
      %s127 = scalar_select %p124, %s125, %s126
      %p130 = pneg %p124
      %p131 = scmp.eq.s32.totalorder %s21, 1
      %p132 = por %p130, %p131
      %p133 = scmp.ne.s32.totalorder %s125, %s128
      %p134 = scmp.eq.s32.totalorder %s21, 0
      %p135 = por %p133, %p134
      %p136 = scmp.ne.s32.totalorder %s125, %s128
      %p137 = scmp.eq.s32.totalorder %s26, 1
      %p138 = por %p136, %p137
      %p139 = scmp.ne.s32.totalorder %s128, %s129
      %p140 = scmp.eq.s32.totalorder %s26, 0
      %p141 = por %p139, %p140
      %p142 = scmp.ne.s32.totalorder %s128, %s129
      %p143 = scmp.eq.s32.totalorder %s27, 1
      %p144 = por %p142, %p143
      %p146 = scmp.ne.s32.totalorder %s129, %s145
      %p147 = scmp.eq.s32.totalorder %s27, 0
      %p148 = por %p146, %p147
      %s149 = ssub.s32 %s28, %s40
      %s150 = ssub.s32 %s29, %s36
      %s151 = sor.u32 %s149, %s150
      %p152 = scmp.eq.s32.totalorder %s151, 0
      %s154 = sadd.s32 %s153, 1
      %s155 = scalar_select %p152, %s153, %s154
      %p158 = pneg %p152
      %p159 = scmp.eq.s32.totalorder %s21, 1
      %p160 = por %p158, %p159
      %p161 = scmp.ne.s32.totalorder %s153, %s156
      %p162 = scmp.eq.s32.totalorder %s21, 0
      %p163 = por %p161, %p162
      %p164 = scmp.ne.s32.totalorder %s153, %s156
      %p165 = scmp.eq.s32.totalorder %s26, 1
      %p166 = por %p164, %p165
      %p167 = scmp.ne.s32.totalorder %s156, %s157
      %p168 = scmp.eq.s32.totalorder %s26, 0
      %p169 = por %p167, %p168
      %p170 = scmp.ne.s32.totalorder %s156, %s157
      %p171 = scmp.eq.s32.totalorder %s27, 1
      %p172 = por %p170, %p171
      %p174 = scmp.ne.s32.totalorder %s157, %s173
      %p175 = scmp.eq.s32.totalorder %s27, 0
      %p176 = por %p174, %p175
      %p177 = scmp.le.s32.totalorder 1, %s21
      %p178 = scmp.lt.s32.totalorder %s21, 3
      %p179 = pnand %p177, %p178
      %p180 = pneg %p179
      // Predicated region
      $region9: #{tpu_custom_call.1} parent=5 // pred_check
        _
      $region10: #{tpu_custom_call.1} parent=5 // pred_check_branch
        %182 = sbr.rel (%p179) target = $region12
      $region11: #{tpu_custom_call.1} parent=5 // pred_region
        %s183 = ssub.s32 %s21, 1
        // Predicated region
        $region13: #{tpu_custom_call.1} parent=11 // pred_check
          %p184 = pneg %p87
        $region14: #{tpu_custom_call.1} parent=11 // pred_check_branch
          %186 = sbr.rel (%p184) target = $region16
        $region15: #{tpu_custom_call.1} parent=11 // pred_region
          %s188 = ssub.s32 128, 128
          %189 = vsyncadd [#allocation6], %s188
          %s190 = smul.addr %s30, 128
          %s191 = scalar_lea.hbm %s1, %s190
          %s193 = sshll.u32 [#allocation5], 4
          %s194 = int_to_ptr.vmem [resolvable:$true] %s193
          %196 = dma.hbm_to_vmem [thread:$0]  %s191, 128, %s194, [#allocation6]
        $region16: #{tpu_custom_call.1} parent=11 // pred_fallthru
          _
        // Predicated region
        $region17: #{tpu_custom_call.1} parent=11 // pred_check
          %p197 = pneg %p113
        $region18: #{tpu_custom_call.1} parent=11 // pred_check_branch
          %199 = sbr.rel (%p197) target = $region20
        $region19: #{tpu_custom_call.1} parent=11 // pred_region
          %s201 = ssub.s32 128, 128
          %202 = vsyncadd [#allocation6], %s201
          %s203 = smul.addr %s30, 128
          %s204 = scalar_lea.hbm %s2, %s203
          %s206 = sshll.u32 [#allocation7], 4
          %s207 = int_to_ptr.vmem [resolvable:$true] %s206
          %209 = dma.hbm_to_vmem [thread:$0]  %s204, 128, %s207, [#allocation6]
        $region20: #{tpu_custom_call.1} parent=11 // pred_fallthru
          _
      $region12: #{tpu_custom_call.1} parent=5 // pred_fallthru
        _
      %p210 = scmp.lt.s32.totalorder %s21, 2
      // Predicated region
      $region21: #{tpu_custom_call.1} parent=5 // pred_check
        %p211 = pneg %p210
      $region22: #{tpu_custom_call.1} parent=5 // pred_check_branch
        %213 = sbr.rel (%p211) target = $region24
      $region23: #{tpu_custom_call.1} parent=5 // pred_region
        // Predicated region
        $region25: #{tpu_custom_call.1} parent=23 // pred_check
          %p214 = pneg %p55
        $region26: #{tpu_custom_call.1} parent=23 // pred_check_branch
          %216 = sbr.rel (%p214) target = $region28
        $region27: #{tpu_custom_call.1} parent=23 // pred_region
          %s217 = sand.u32 %s45, 1
          %s218 = scalar_lea.sflag [#allocation3], %s217
          %s219 = sand.u32 %s45, 1
          %s220 = smul.addr %s219, 8
          %s221 = scalar_lea.vmem [#allocation2], %s220
          %s223 = ssub.s32 128, 128
          %224 = vsyncadd %s218, %s223
          %s225 = sadd.s32 %s29, %s28
          %s226 = smul.addr %s225, 128
          %s227 = scalar_lea.hbm %s0, %s226
          %s229 = sshll.u32 %s221, 4
          %s230 = int_to_ptr.vmem [resolvable:$true] %s229
          %232 = dma.hbm_to_vmem [thread:$0]  %s227, 128, %s230, %s218
        $region28: #{tpu_custom_call.1} parent=23 // pred_fallthru
          _
      $region24: #{tpu_custom_call.1} parent=5 // pred_fallthru
        _
      %p233 = scmp.le.s32.totalorder 1, %s21
      %p234 = scmp.lt.s32.totalorder %s21, 3
      %p235 = pnand %p233, %p234
      %p236 = pneg %p235
      // Predicated region
      $region29: #{tpu_custom_call.1} parent=5 // pred_check
        _
      $region30: #{tpu_custom_call.1} parent=5 // pred_check_branch
        %238 = sbr.rel (%p235) target = $region32
      $region31: #{tpu_custom_call.1} parent=5 // pred_region
        %s239 = ssub.s32 %s21, 1
        %s240 = sand.u32 %s48, 1
        %s241 = scalar_lea.sflag [#allocation3], %s240
        %s242 = sand.u32 %s48, 1
        %s243 = smul.addr %s242, 8
        %s244 = scalar_lea.vmem [#allocation2], %s243
        // Predicated region
        $region33: #{tpu_custom_call.1} parent=31 // pred_check
          %p245 = pneg %p61
        $region34: #{tpu_custom_call.1} parent=31 // pred_check_branch
          %247 = sbr.rel (%p245) target = $region36
        $region35: #{tpu_custom_call.1} parent=31 // pred_region
          %248 = dma.done %s241, 128
        $region36: #{tpu_custom_call.1} parent=31 // pred_fallthru
          _
        // Predicated region
        $region37: #{tpu_custom_call.1} parent=31 // pred_check
          %p249 = pneg %p87
        $region38: #{tpu_custom_call.1} parent=31 // pred_check_branch
          %251 = sbr.rel (%p249) target = $region40
        $region39: #{tpu_custom_call.1} parent=31 // pred_region
          %252 = dma.done [#allocation6], 128
        $region40: #{tpu_custom_call.1} parent=31 // pred_fallthru
          _
        // Predicated region
        $region41: #{tpu_custom_call.1} parent=31 // pred_check
          %p253 = pneg %p113
        $region42: #{tpu_custom_call.1} parent=31 // pred_check_branch
          %255 = sbr.rel (%p253) target = $region44
        $region43: #{tpu_custom_call.1} parent=31 // pred_region
          %256 = dma.done [#allocation6], 128
        $region44: #{tpu_custom_call.1} parent=31 // pred_fallthru
          _
        %s257 = sand.u32 %s48, 1
        %s258 = scalar_lea.sflag [#allocation3], %s257
        %s259 = sand.u32 %s48, 1
        %s260 = smul.addr %s259, 8
        %s261 = scalar_lea.vmem [#allocation2], %s260
        %p262 = pneg %p61
        %p263 = pneg %p58
        %p264 = pneg %p87
        %p265 = pneg %p84
        %p266 = pneg %p113
        %p267 = pneg %p110
        %p268 = pneg %p141
        %p269 = pneg %p138
        %s270 = sand.u32 %s128, 1
        %s271 = scalar_lea.sflag [#allocation4], %s270
        %s272 = sand.u32 %s128, 1
        %s273 = smul.addr %s272, 8
        %s274 = scalar_lea.vmem [#allocation8], %s273
        %p275 = pneg %p169
        %p276 = pneg %p166
        %s277 = sand.u32 %s156, 1
        %s278 = scalar_lea.sflag [#allocation10], %s277
        %s279 = sand.u32 %s156, 1
        %s280 = smul.addr %s279, 8
        %s281 = scalar_lea.vmem [#allocation9], %s280
        %v282 = vld [vmem:[%s244] sm:$0xff]
        %v283 = vmul.f32 %v282, 0.17677669
        %v284 = vld [vmem:[#allocation5] sm:$0xff]
        %vm285 = vcmask 261120
        %v287 = vsel %vm285, %v283, 0
        %v290 = vsel %vm285, %v284, 0
        %292 = vmatprep.subr.mxu0 0.0
        %293 = vmatpush1.xpose.msra.mxu0 %v290
        %294 = vmatprep.subr.mxu0 0.0
        %295 = vmatpush1.xpose.msra.mxu0 0.0
        %296 = vmatprep.subr.mxu0 0.0
        %297 = vmatpush1.xpose.msra.mxu0 0.0
        %298 = vmatprep.subr.mxu0 0.0
        %299 = vmatpush1.xpose.msra.mxu0 0.0
        %300 = vmatprep.subr.mxu0 0.0
        %301 = vmatpush1.xpose.msra.mxu0 0.0
        %302 = vmatprep.subr.mxu0 0.0
        %303 = vmatpush1.xpose.msra.mxu0 0.0
        %304 = vmatprep.subr.mxu0 0.0
        %305 = vmatpush1.xpose.msra.mxu0 0.0
        %306 = vmatprep.subr.mxu0 0.0
        %307 = vmatpush1.xpose.msra.mxu0 0.0
        %308 = vmatprep.subr.mxu0 0.0
        %309 = vmatpush1.xpose.msra.mxu0 0.0
        %310 = vmatprep.subr.mxu0 0.0
        %311 = vmatpush1.xpose.msra.mxu0 0.0
        %312 = vmatprep.subr.mxu0 0.0
        %313 = vmatpush1.xpose.msra.mxu0 0.0
        %314 = vmatprep.subr.mxu0 0.0
        %315 = vmatpush1.xpose.msra.mxu0 0.0
        %316 = vmatprep.subr.mxu0 0.0
        %317 = vmatpush1.xpose.msra.mxu0 0.0
        %318 = vmatprep.subr.mxu0 0.0
        %319 = vmatpush1.xpose.msra.mxu0 0.0
        %320 = vmatprep.subr.mxu0 0.0
        %321 = vmatpush1.xpose.msra.mxu0 0.0
        %322 = vmatprep.subr.mxu0 0.0
        %323 = vmatpush1.xpose.msra.mxu0 0.0
        %324 = vmatprep.subr.mxu0 0.0
        %325 = vmatpush1.xpose.msra.mxu0 0.0
        %326 = vmatprep.subr.mxu0 0.0
        %327 = vmatpush1.xpose.msra.mxu0 0.0
        %328 = vmatprep.subr.mxu0 0.0
        %329 = vmatpush1.xpose.msra.mxu0 0.0
        %330 = vmatprep.subr.mxu0 0.0
        %331 = vmatpush1.xpose.msra.mxu0 0.0
        %332 = vmatprep.subr.mxu0 0.0
        %333 = vmatpush1.xpose.msra.mxu0 0.0
        %334 = vmatprep.subr.mxu0 0.0
        %335 = vmatpush1.xpose.msra.mxu0 0.0
        %336 = vmatprep.subr.mxu0 0.0
        %337 = vmatpush1.xpose.msra.mxu0 0.0
        %338 = vmatprep.subr.mxu0 0.0
        %339 = vmatpush1.xpose.msra.mxu0 0.0
        %340 = vmatprep.subr.mxu0 0.0
        %341 = vmatpush1.xpose.msra.mxu0 0.0
        %342 = vmatprep.subr.mxu0 0.0
        %343 = vmatpush1.xpose.msra.mxu0 0.0
        %344 = vmatprep.subr.mxu0 0.0
        %345 = vmatpush1.xpose.msra.mxu0 0.0
        %346 = vmatprep.subr.mxu0 0.0
        %347 = vmatpush1.xpose.msra.mxu0 0.0
        %348 = vmatprep.subr.mxu0 0.0
        %349 = vmatpush1.xpose.msra.mxu0 0.0
        %350 = vmatprep.subr.mxu0 0.0
        %351 = vmatpush1.xpose.msra.mxu0 0.0
        %352 = vmatprep.subr.mxu0 0.0
        %353 = vmatpush1.xpose.msra.mxu0 0.0
        %354 = vmatprep.subr.mxu0 0.0
        %355 = vmatpush1.xpose.msra.mxu0 0.0
        %356 = vmatprep.mubr.f32.mxu0 0.0
        %357 = vmatmul.mubr.f32.gmra.mrb[0].mxu0 %v287
        %v358 = vpop.f32.mrb[0].mxu0
        %v359 = vadd.f32 0.0, %v358
        %v360 = vpop.f32.mrb[0].mxu0
        %361 = vdwg.mxu0
        %vm362 = vcmask 64512
        %v363 = vsel %vm362, %v359, -inf
        %364 = vmax.xlane.f32.xlu0 %v363
        %v365 = vpop.xlane.xlu0 %364
        %v366 = vsub.f32 %v359, %v365
        %v367 = vmul.f32 %v366, 1.442695
        %v368 = vpow.pop %v367
        %v369 = vsel %vm362, %v368, 0.0
        %370 = vadd.xlane.f32.xlu0 %v369
        %v371 = vpop.xlane.xlu0 %370
        %v372 = vrcp.pop %v371
        %v373 = vmul.f32 %v368, %v372
        %v374 = vld [vmem:[#allocation7] sm:$0xff]
        %v376 = vsel %vm362, %v373, 0
        %378 = vmatprep.subr.mxu0 0.0
        %379 = vmatpush1.msra.mxu0 %v374
        %380 = vmatprep.subr.mxu0 0.0
        %381 = vmatpush1.msra.mxu0 0.0
        %382 = vmatprep.subr.mxu0 0.0
        %383 = vmatpush1.msra.mxu0 0.0
        %384 = vmatprep.subr.mxu0 0.0
        %385 = vmatpush1.msra.mxu0 0.0
        %386 = vmatprep.subr.mxu0 0.0
        %387 = vmatpush1.msra.mxu0 0.0
        %388 = vmatprep.subr.mxu0 0.0
        %389 = vmatpush1.msra.mxu0 0.0
        %390 = vmatprep.subr.mxu0 0.0
        %391 = vmatpush1.msra.mxu0 0.0
        %392 = vmatprep.subr.mxu0 0.0
        %393 = vmatpush1.msra.mxu0 0.0
        %394 = vmatprep.subr.mxu0 0.0
        %395 = vmatpush1.msra.mxu0 0.0
        %396 = vmatprep.subr.mxu0 0.0
        %397 = vmatpush1.msra.mxu0 0.0
        %398 = vmatprep.subr.mxu0 0.0
        %399 = vmatpush1.msra.mxu0 0.0
        %400 = vmatprep.subr.mxu0 0.0
        %401 = vmatpush1.msra.mxu0 0.0
        %402 = vmatprep.subr.mxu0 0.0
        %403 = vmatpush1.msra.mxu0 0.0
        %404 = vmatprep.subr.mxu0 0.0
        %405 = vmatpush1.msra.mxu0 0.0
        %406 = vmatprep.subr.mxu0 0.0
        %407 = vmatpush1.msra.mxu0 0.0
        %408 = vmatprep.subr.mxu0 0.0
        %409 = vmatpush1.msra.mxu0 0.0
        %410 = vmatprep.subr.mxu0 0.0
        %411 = vmatpush1.msra.mxu0 0.0
        %412 = vmatprep.subr.mxu0 0.0
        %413 = vmatpush1.msra.mxu0 0.0
        %414 = vmatprep.subr.mxu0 0.0
        %415 = vmatpush1.msra.mxu0 0.0
        %416 = vmatprep.subr.mxu0 0.0
        %417 = vmatpush1.msra.mxu0 0.0
        %418 = vmatprep.subr.mxu0 0.0
        %419 = vmatpush1.msra.mxu0 0.0
        %420 = vmatprep.subr.mxu0 0.0
        %421 = vmatpush1.msra.mxu0 0.0
        %422 = vmatprep.subr.mxu0 0.0
        %423 = vmatpush1.msra.mxu0 0.0
        %424 = vmatprep.subr.mxu0 0.0
        %425 = vmatpush1.msra.mxu0 0.0
        %426 = vmatprep.subr.mxu0 0.0
        %427 = vmatpush1.msra.mxu0 0.0
        %428 = vmatprep.subr.mxu0 0.0
        %429 = vmatpush1.msra.mxu0 0.0
        %430 = vmatprep.subr.mxu0 0.0
        %431 = vmatpush1.msra.mxu0 0.0
        %432 = vmatprep.subr.mxu0 0.0
        %433 = vmatpush1.msra.mxu0 0.0
        %434 = vmatprep.subr.mxu0 0.0
        %435 = vmatpush1.msra.mxu0 0.0
        %436 = vmatprep.subr.mxu0 0.0
        %437 = vmatpush1.msra.mxu0 0.0
        %438 = vmatprep.subr.mxu0 0.0
        %439 = vmatpush1.msra.mxu0 0.0
        %440 = vmatprep.subr.mxu0 0.0
        %441 = vmatpush1.msra.mxu0 0.0
        %442 = vmatprep.mubr.f32.mxu0 0.0
        %443 = vmatmul.mubr.f32.gmra.mrb[0].mxu0 %v376
        %v444 = vpop.f32.mrb[0].mxu0
        %v445 = vadd.f32 0.0, %v444
        %v446 = vpop.f32.mrb[0].mxu0
        %447 = vdwg.mxu0
        %448 = vst.msk [vmem:[%s274] sm:$0xff] %vm285, %v445
        %449 = vst.msk [vmem:[%s281] sm:$0xff] %vm362, %v373
        %s450 = sand.u32 %s128, 1
        %s451 = scalar_lea.sflag [#allocation4], %s450
        %s452 = sand.u32 %s128, 1
        %s453 = smul.addr %s452, 8
        %s454 = scalar_lea.vmem [#allocation8], %s453
        %s455 = sand.u32 %s156, 1
        %s456 = scalar_lea.sflag [#allocation10], %s455
        %s457 = sand.u32 %s156, 1
        %s458 = smul.addr %s457, 8
        %s459 = scalar_lea.vmem [#allocation9], %s458
        // Predicated region
        $region45: #{tpu_custom_call.1} parent=31 // pred_check
          %p460 = pneg %p138
        $region46: #{tpu_custom_call.1} parent=31 // pred_check_branch
          %462 = sbr.rel (%p460) target = $region48
        $region47: #{tpu_custom_call.1} parent=31 // pred_region
          %s464 = ssub.s32 128, 128
          %465 = vsyncadd %s451, %s464
          %s466 = sadd.s32 %s31, %s30
          %s467 = smul.addr %s466, 128
          %s468 = scalar_lea.hbm %s3, %s467
          %s470 = sshll.u32 %s454, 4
          %s471 = int_to_ptr.vmem [resolvable:$true] %s470
          %473 = dma.vmem_to_hbm [thread:$0]  %s471, 128, %s468, %s451
        $region48: #{tpu_custom_call.1} parent=31 // pred_fallthru
          _
        // Predicated region
        $region49: #{tpu_custom_call.1} parent=31 // pred_check
          %p474 = pneg %p166
        $region50: #{tpu_custom_call.1} parent=31 // pred_check_branch
          %476 = sbr.rel (%p474) target = $region52
        $region51: #{tpu_custom_call.1} parent=31 // pred_region
          %s478 = ssub.s32 128, 128
          %479 = vsyncadd %s456, %s478
          %s480 = sadd.s32 %s31, %s30
          %s481 = smul.addr %s480, 128
          %s482 = scalar_lea.hbm %s4, %s481
          %s484 = sshll.u32 %s459, 4
          %s485 = int_to_ptr.vmem [resolvable:$true] %s484
          %487 = dma.vmem_to_hbm [thread:$0]  %s485, 128, %s482, %s456
        $region52: #{tpu_custom_call.1} parent=31 // pred_fallthru
          _
      $region32: #{tpu_custom_call.1} parent=5 // pred_fallthru
        _
      %p488 = scmp.le.s32.totalorder 2, %s21
      // Predicated region
      $region53: #{tpu_custom_call.1} parent=5 // pred_check
        %p489 = pneg %p488
      $region54: #{tpu_custom_call.1} parent=5 // pred_check_branch
        %491 = sbr.rel (%p489) target = $region56
      $region55: #{tpu_custom_call.1} parent=5 // pred_region
        %s492 = ssub.s32 %s21, 2
        // Predicated region
        $region57: #{tpu_custom_call.1} parent=55 // pred_check
          %p493 = pneg %p144
        $region58: #{tpu_custom_call.1} parent=55 // pred_check_branch
          %495 = sbr.rel (%p493) target = $region60
        $region59: #{tpu_custom_call.1} parent=55 // pred_region
          %s496 = sand.u32 %s129, 1
          %s497 = scalar_lea.sflag [#allocation4], %s496
          %s498 = sand.u32 %s129, 1
          %s499 = smul.addr %s498, 8
          %s500 = scalar_lea.vmem [#allocation8], %s499
          %501 = dma.done %s497, 128
        $region60: #{tpu_custom_call.1} parent=55 // pred_fallthru
          _
        // Predicated region
        $region61: #{tpu_custom_call.1} parent=55 // pred_check
          %p502 = pneg %p172
        $region62: #{tpu_custom_call.1} parent=55 // pred_check_branch
          %504 = sbr.rel (%p502) target = $region64
        $region63: #{tpu_custom_call.1} parent=55 // pred_region
          %s505 = sand.u32 %s157, 1
          %s506 = scalar_lea.sflag [#allocation10], %s505
          %s507 = sand.u32 %s157, 1
          %s508 = smul.addr %s507, 8
          %s509 = scalar_lea.vmem [#allocation9], %s508
          %510 = dma.done %s506, 128
        $region64: #{tpu_custom_call.1} parent=55 // pred_fallthru
          _
      $region56: #{tpu_custom_call.1} parent=5 // pred_fallthru
        _
    $region6: #{tpu_custom_call.1} parent=1 // loop_footer
      %s25 = sadd.s32 1, %s21
    $region7: #{tpu_custom_call.1} parent=1 // loop_footer_branch
      %20 = sbr.rel target = $region3
    $region8: #{tpu_custom_call.1} parent=1 // loop_exit
      _
    %511 = vsyncpa [#allocation3], 1
    %s512 = scalar_lea.sflag [#allocation3], 1
    %513 = vsyncpa %s512, 1
    %514 = vsyncpa [#allocation6], 1
    %515 = vsyncpa [#allocation4], 1
    %s516 = scalar_lea.sflag [#allocation4], 1
    %517 = vsyncpa %s516, 1
    %518 = vsyncpa [#allocation10], 1
    %s519 = scalar_lea.sflag [#allocation10], 1
    %520 = vsyncpa %s519, 1

</llo_original>
